<compile_context>
chip_gen: v7x
topology: tpu7x:2x2x1
jax: 0.10.0
libtpu: 0.0.40
codegen_flags: <defaults>
</compile_context>

<pallas_src>
import math

import jax
import jax.numpy as jnp
from jax.experimental import pallas as pl
from jax.experimental.pallas import tpu as pltpu


def _timenorm_kernel(x_ref, o_ref):
    # Block shape is either (bt, C, t_hw) or (bt, C, s_hw, 128); the channel
    # axis is axis=1 in both cases.
    x = x_ref[...]
    x32 = x.astype(jnp.float32)
    ssq = jnp.sum(x32 * x32, axis=1, keepdims=True)      # f32 accumulation
    inv = jax.lax.rsqrt(ssq)                              # EUP rsqrt
    o_ref[...] = (x32 * inv).astype(o_ref.dtype)          # VPU multiply


def _largest_divisor_leq(n: int, cap: int) -> int:
    cap = max(1, min(n, cap))
    for d in range(cap, 0, -1):
        if n % d == 0:
            return d
    return 1


def _default_target_block_bytes() -> int:
    # ~2 MiB blocks for v5e/v6e, ~4 MiB for v7x (64 MiB VMEM, ~3.2 TB/s HBM).
    target = 2 << 20
    try:
        info = pltpu.get_tpu_info()
        if getattr(info, "vmem_capacity_bytes", 128 << 20) <= (64 << 20):
            target = 4 << 20
    except Exception:
        pass
    return target


def time_norm(x: jax.Array, *, training: bool = False,
              enable_on_training: bool = False,
              target_block_bytes: int | None = None,
              vmem_limit_bytes: int | None = None) -> jax.Array:
    """TimeNorm forward. x: (B, C, H, W)."""
    if training and not enable_on_training:
        return x

    B, C, H, W = x.shape
    HW = H * W
    itemsize = jnp.dtype(x.dtype).itemsize

    if target_block_bytes is None:
        target_block_bytes = _default_target_block_bytes()
    target_elems = max(1, target_block_bytes // itemsize)

    if HW % 128 == 0:
        # 4-D layout: (B, C, S, 128).  Free trailing-dim split (no copy).
        S = HW // 128
        x_in = x.reshape(B, C, S, 128)

        per_s_elems = C * 128
        s_cap = max(1, target_elems // per_s_elems)
        if s_cap >= S or S <= 8:
            s_hw = S                       # full extent (always legal)
        else:
            s_hw = max(8, (min(s_cap, S) // 8) * 8)   # multiple of 8
        hw_steps = pl.cdiv(S, s_hw)

        bt = 1
        if s_hw == S:
            row_elems = C * S * 128
            bt = _largest_divisor_leq(B, max(1, target_elems // max(row_elems, 1)))
        # Keep >= 4 total grid steps where possible (>= 2 per core on v7x).
        while bt > 1 and (B // bt) * hw_steps < 4:
            bt = _largest_divisor_leq(B, bt - 1)
        while (B // bt) * hw_steps < 4 and s_hw >= 16:
            s_hw = max(8, ((s_hw // 2) // 8) * 8)
            hw_steps = pl.cdiv(S, s_hw)

        grid = (B // bt, hw_steps)
        block = (bt, C, s_hw, 128)
        spec = pl.BlockSpec(block, lambda b, s: (b, 0, s, 0))
        flat_shape = (B, C, S, 128)
    else:
        # 3-D layout: (B, C, HW), lane tile a multiple of 128 (last block may
        # overhang HW; OOB lanes are masked and never contaminate valid output).
        x_in = x.reshape(B, C, HW)

        t_cap = max(1, target_elems // C)
        if t_cap >= HW or HW <= 128:
            t_hw = HW                      # full extent (always legal)
        else:
            t_hw = max(128, (min(t_cap, HW) // 128) * 128)   # multiple of 128
        hw_steps = pl.cdiv(HW, t_hw)

        bt = 1
        if t_hw == HW:
            row_elems = C * HW
            bt = _largest_divisor_leq(B, max(1, target_elems // max(row_elems, 1)))
        while bt > 1 and (B // bt) * hw_steps < 4:
            bt = _largest_divisor_leq(B, bt - 1)
        while (B // bt) * hw_steps < 4 and t_hw >= 256:
            t_hw = max(128, ((t_hw // 2) // 128) * 128)
            hw_steps = pl.cdiv(HW, t_hw)

        grid = (B // bt, hw_steps)
        block = (bt, C, t_hw)
        spec = pl.BlockSpec(block, lambda b, h: (b, 0, h))
        flat_shape = (B, C, HW)

    # VMEM budget: 2x double-buffered (input + output) blocks, plus in-kernel
    # f32 temporaries when the input is narrower than f32.
    block_bytes = math.prod(block) * itemsize
    f32_factor = max(1, 4 // itemsize)
    footprint = 2 * 2 * block_bytes + 3 * block_bytes * f32_factor
    if vmem_limit_bytes is None:
        vmem_limit_bytes = int(min(48 << 20, max(2 * footprint, 16 << 20)))

    cost = pl.CostEstimate(
        flops=3 * B * C * HW + B * HW,          # squares + adds + final scale
        transcendentals=B * HW,                 # one rsqrt per pixel
        bytes_accessed=2 * B * C * HW * itemsize,
    )

    out_flat = pl.pallas_call(
        _timenorm_kernel,
        out_shape=jax.ShapeDtypeStruct(flat_shape, x.dtype),
        grid_spec=pltpu.PrefetchScalarGridSpec(
            num_scalar_prefetch=0,
            grid=grid,
            in_specs=[spec],
            out_specs=spec,
        ),
        compiler_params=pltpu.CompilerParams(
            dimension_semantics=("parallel", "parallel"),
            vmem_limit_bytes=vmem_limit_bytes),
        cost_estimate=cost,
    )(x_in)

    return out_flat.reshape(B, C, H, W)


if __name__ == "__main__":
    key = jax.random.PRNGKey(0)

    # Main check: (B, C, H, W) = (2, 4, 16, 16) — HW % 128 == 0, 4-D path.
    x = jax.random.normal(key, (2, 4, 16, 16), dtype=jnp.float32)
    out = jax.block_until_ready(time_norm(x))
    ref = x / jnp.sqrt(jnp.sum(x * x, axis=1, keepdims=True))
    assert out.shape == x.shape
    assert jnp.allclose(out, ref, atol=1e-5, rtol=1e-5)

    # Secondary check: HW not a multiple of 128 exercises the 3-D path.
    key2 = jax.random.split(key)[0]
    y = jax.random.normal(key2, (2, 3, 10, 10), dtype=jnp.float32)
    out_y = jax.block_until_ready(time_norm(y))
    ref_y = y / jnp.sqrt(jnp.sum(y * y, axis=1, keepdims=True))
    assert jnp.allclose(out_y, ref_y, atol=1e-5, rtol=1e-5)

    # Eval-path identity when training without enable_on_training.
    skipped = time_norm(x, training=True, enable_on_training=False)
    assert skipped is x

    print("KERNEL_OK")
</pallas_src>

<mosaic_0001>
module attributes {stable_mosaic.version = 11 : i64} {
  func.func @_timenorm_kernel(%arg0: i32, %arg1: i32, %arg2: memref<1x4x2x128xf32, #tpu.memory_space<vmem>>, %arg3: memref<1x4x2x128xf32, #tpu.memory_space<vmem>>) attributes {dimension_semantics = [#tpu.dimension_semantics<parallel>, #tpu.dimension_semantics<parallel>], iteration_bounds = array<i64: 2, 1>, scalar_prefetch = 0 : i64, scratch_operands = 0 : i64, tpu.core_type = #tpu.core_type<tc>, window_params = [{transform_indices = @transform_0, window_bounds = array<i64: 1, 4, 2, 128>}, {transform_indices = @transform_1, window_bounds = array<i64: 1, 4, 2, 128>}]} {
    %c0 = arith.constant 0 : index
    %c0_0 = arith.constant 0 : index
    %c0_1 = arith.constant 0 : index
    %c0_2 = arith.constant 0 : index
    %0 = vector.load %arg2[%c0, %c0_0, %c0_1, %c0_2] : memref<1x4x2x128xf32, #tpu.memory_space<vmem>>, vector<1x4x2x128xf32>
    %1 = arith.mulf %0, %0 : vector<1x4x2x128xf32>
    %cst = arith.constant dense<0.000000e+00> : vector<1x2x128xf32>
    %2 = vector.multi_reduction <add>, %1, %cst [1] : vector<1x4x2x128xf32> to vector<1x2x128xf32>
    %3 = vector.shape_cast %2 : vector<1x2x128xf32> to vector<1x1x2x128xf32>
    %4 = math.rsqrt %3 : vector<1x1x2x128xf32>
    %5 = vector.broadcast %4 : vector<1x1x2x128xf32> to vector<1x4x2x128xf32>
    %6 = arith.mulf %0, %5 : vector<1x4x2x128xf32>
    %c0_3 = arith.constant 0 : index
    %c0_4 = arith.constant 0 : index
    %c0_5 = arith.constant 0 : index
    %c0_6 = arith.constant 0 : index
    %7 = vector.load %arg3[%c0_3, %c0_4, %c0_5, %c0_6] : memref<1x4x2x128xf32, #tpu.memory_space<vmem>>, vector<1x4x2x128xf32>
    tpu.vector_store %arg3[%c0_3, %c0_4, %c0_5, %c0_6], %6 {strides = array<i32>} : memref<1x4x2x128xf32, #tpu.memory_space<vmem>>, vector<1x4x2x128xf32>,
    return
  }
  func.func @transform_0(%arg0: i32, %arg1: i32) -> (i32, i32, i32, i32) {
    %c0_i32 = arith.constant 0 : i32
    %c0_i32_0 = arith.constant 0 : i32
    %c0_i32_1 = arith.constant 0 : i32
    return %arg0, %c0_i32, %arg1, %c0_i32_0 : i32, i32, i32, i32
  }
  func.func @transform_1(%arg0: i32, %arg1: i32) -> (i32, i32, i32, i32) {
    %c0_i32 = arith.constant 0 : i32
    %c0_i32_0 = arith.constant 0 : i32
    %c0_i32_1 = arith.constant 0 : i32
    return %arg0, %c0_i32, %arg1, %c0_i32_0 : i32, i32, i32, i32
  }
}

</mosaic_0001>

<llo_original>
// kernel: tpu_custom_call.1
$region0: #{tpu_custom_call.1}
  #allocation0 [shape = 'u32[]', space=smem, size = 0x4, offset = 0x4, fixed_abs, tag = 'smem constant byte address 0x4 - core index']
  #allocation1 [shape = 'u32[144,128]{1,0:T(1,128)}', space=vmem, size = 0x12000, scoped, tag = 'internal scratch']
  %s0 = inlined_call_operand.hbm [shape: f32[2,4,2,128], index: 0, kind: input, shape index: {}]
  %s1 = inlined_call_operand.hbm [shape: f32[2,4,2,128], index: 1, kind: output, shape index: {}]
  %s2 = sld [smem:[#allocation0]]
  $region41: #{tpu_custom_call.1} parent=0
    _
  %s4 = ssub.s32 1, %s2
  %s5 = scalar_select 0, %s4, %s2
  $region1: #{tpu_custom_call.1} parent=0
    #allocation2 [shape = 'u8[8192]{0}', space=vmem, size = 0x2000, scoped, tag = 'input window, operand 0']
    #allocation3 [shape = 's32[2]{0}', space=sflag, size = 0x8, scoped, tag = 'scoped memory for tpu_custom_call.1']
    #allocation4 [shape = 's32[2]{0}', space=sflag, size = 0x8, scoped, tag = 'scoped memory for tpu_custom_call.1']
    #allocation5 [shape = 'u8[8192]{0}', space=vmem, size = 0x2000, scoped, tag = 'output window, operand 0']
    %6 = vsyncpa [#allocation3], 0
    %s7 = scalar_lea.sflag [#allocation3], 1
    %8 = vsyncpa %s7, 0
    %9 = vsyncpa [#allocation4], 0
    %s10 = scalar_lea.sflag [#allocation4], 1
    %11 = vsyncpa %s10, 0
    loop: start=0, step=1, limit=4
    $region2: #{tpu_custom_call.1} parent=1 // loop_pre_header
      _
    $region3: #{tpu_custom_call.1} parent=1 // loop_header
      %s13 = sphi 0, %s17
      %p14 = scmp.ge.s32.totalorder %s13, 4
      %s20 = sphi 0, %s32
      %s21 = sphi 0, %s28
      %s22 = sphi 0, %s20
      %s23 = sphi 0, %s21
      %s24 = sphi 0, %s22
      %s25 = sphi 0, %s23
      %s37 = sphi 0, %s39
      %s40 = sphi 0, %s37
      %s41 = sphi 0, %s40
      %s57 = sphi 0, %s41
      %s65 = sphi 0, %s67
      %s68 = sphi 0, %s65
      %s69 = sphi 0, %s68
      %s85 = sphi 0, %s69
    $region4: #{tpu_custom_call.1} parent=1 // loop_header_branch
      %16 = sbr.rel (%p14) target = $region8
    $region5: #{tpu_custom_call.1} parent=1 // loop_body
      %s18 = ssub.s32 %s13, 1
      %s19 = ssub.s32 %s13, 2
      %s26 = sadd.s32 1, %s21
      %p27 = scmp.ge.s32.totalorder %s26, 1
      %s28 = scalar_select %p27, 0, %s26
      %s29 = sadd.s32 1, %s20
      %s30 = scalar_select %p27, %s29, %s20
      %p31 = scmp.ge.s32.totalorder %s30, 2
      %s32 = scalar_select %p31, 0, %s30
      %s33 = ssub.s32 %s20, %s32
      %s34 = ssub.s32 %s21, %s28
      %s35 = sor.u32 %s33, %s34
      %p36 = scmp.eq.s32.totalorder %s35, 0
      %s38 = sadd.s32 %s37, 1
      %s39 = scalar_select %p36, %s37, %s38
      %p42 = pneg %p36
      %p43 = scmp.eq.s32.totalorder %s13, 1
      %p44 = por %p42, %p43
      %p45 = scmp.ne.s32.totalorder %s37, %s40
      %p46 = scmp.eq.s32.totalorder %s13, 0
      %p47 = por %p45, %p46
      %p48 = scmp.ne.s32.totalorder %s37, %s40
      %p49 = scmp.eq.s32.totalorder %s18, 1
      %p50 = por %p48, %p49
      %p51 = scmp.ne.s32.totalorder %s40, %s41
      %p52 = scmp.eq.s32.totalorder %s18, 0
      %p53 = por %p51, %p52
      %p54 = scmp.ne.s32.totalorder %s40, %s41
      %p55 = scmp.eq.s32.totalorder %s19, 1
      %p56 = por %p54, %p55
      %p58 = scmp.ne.s32.totalorder %s41, %s57
      %p59 = scmp.eq.s32.totalorder %s19, 0
      %p60 = por %p58, %p59
      %s61 = ssub.s32 %s20, %s32
      %s62 = ssub.s32 %s21, %s28
      %s63 = sor.u32 %s61, %s62
      %p64 = scmp.eq.s32.totalorder %s63, 0
      %s66 = sadd.s32 %s65, 1
      %s67 = scalar_select %p64, %s65, %s66
      %p70 = pneg %p64
      %p71 = scmp.eq.s32.totalorder %s13, 1
      %p72 = por %p70, %p71
      %p73 = scmp.ne.s32.totalorder %s65, %s68
      %p74 = scmp.eq.s32.totalorder %s13, 0
      %p75 = por %p73, %p74
      %p76 = scmp.ne.s32.totalorder %s65, %s68
      %p77 = scmp.eq.s32.totalorder %s18, 1
      %p78 = por %p76, %p77
      %p79 = scmp.ne.s32.totalorder %s68, %s69
      %p80 = scmp.eq.s32.totalorder %s18, 0
      %p81 = por %p79, %p80
      %p82 = scmp.ne.s32.totalorder %s68, %s69
      %p83 = scmp.eq.s32.totalorder %s19, 1
      %p84 = por %p82, %p83
      %p86 = scmp.ne.s32.totalorder %s69, %s85
      %p87 = scmp.eq.s32.totalorder %s19, 0
      %p88 = por %p86, %p87
      %p89 = scmp.le.s32.totalorder 1, %s13
      %p90 = scmp.lt.s32.totalorder %s13, 3
      %p91 = pnand %p89, %p90
      %p92 = pneg %p91
      // Predicated region
      $region9: #{tpu_custom_call.1} parent=5 // pred_check
        _
      $region10: #{tpu_custom_call.1} parent=5 // pred_check_branch
        %94 = sbr.rel (%p91) target = $region12
      $region11: #{tpu_custom_call.1} parent=5 // pred_region
        %s95 = ssub.s32 %s13, 1
      $region12: #{tpu_custom_call.1} parent=5 // pred_fallthru
        _
      %p96 = scmp.lt.s32.totalorder %s13, 2
      // Predicated region
      $region13: #{tpu_custom_call.1} parent=5 // pred_check
        %p97 = pneg %p96
      $region14: #{tpu_custom_call.1} parent=5 // pred_check_branch
        %99 = sbr.rel (%p97) target = $region16
      $region15: #{tpu_custom_call.1} parent=5 // pred_region
        // Predicated region
        $region17: #{tpu_custom_call.1} parent=15 // pred_check
          %p100 = pneg %p47
        $region18: #{tpu_custom_call.1} parent=15 // pred_check_branch
          %102 = sbr.rel (%p100) target = $region20
        $region19: #{tpu_custom_call.1} parent=15 // pred_region
          %s103 = sand.u32 %s37, 1
          %s104 = scalar_lea.sflag [#allocation3], %s103
          %s105 = sand.u32 %s37, 1
          %s106 = smul.addr %s105, 8
          %s107 = scalar_lea.vmem [#allocation2], %s106
          %s109 = ssub.s32 128, 128
          %110 = vsyncadd %s104, %s109
          %s111 = smul.addr %s20, 4
          %s112 = sadd.s32 %s21, %s111
          %s113 = smul.addr %s112, 32
          %s114 = scalar_lea.hbm %s0, %s113
          %s115 = sshll.u32 %s107, 4
          %s116 = int_to_ptr.vmem [resolvable:$true] %s115
          %121 = dma.hbm_to_vmem [thread:$0]  %s114, 128, %s116, %s104, 32, 32, 2
        $region20: #{tpu_custom_call.1} parent=15 // pred_fallthru
          _
      $region16: #{tpu_custom_call.1} parent=5 // pred_fallthru
        _
      %p122 = scmp.le.s32.totalorder 1, %s13
      %p123 = scmp.lt.s32.totalorder %s13, 3
      %p124 = pnand %p122, %p123
      %p125 = pneg %p124
      // Predicated region
      $region21: #{tpu_custom_call.1} parent=5 // pred_check
        _
      $region22: #{tpu_custom_call.1} parent=5 // pred_check_branch
        %127 = sbr.rel (%p124) target = $region24
      $region23: #{tpu_custom_call.1} parent=5 // pred_region
        %s128 = ssub.s32 %s13, 1
        %s129 = sand.u32 %s40, 1
        %s130 = scalar_lea.sflag [#allocation3], %s129
        %s131 = sand.u32 %s40, 1
        %s132 = smul.addr %s131, 8
        %s133 = scalar_lea.vmem [#allocation2], %s132
        // Predicated region
        $region25: #{tpu_custom_call.1} parent=23 // pred_check
          %p134 = pneg %p53
        $region26: #{tpu_custom_call.1} parent=23 // pred_check_branch
          %136 = sbr.rel (%p134) target = $region28
        $region27: #{tpu_custom_call.1} parent=23 // pred_region
          %137 = dma.done %s130, 128
        $region28: #{tpu_custom_call.1} parent=23 // pred_fallthru
          _
        %s138 = sand.u32 %s40, 1
        %s139 = scalar_lea.sflag [#allocation3], %s138
        %s140 = sand.u32 %s40, 1
        %s141 = smul.addr %s140, 8
        %s142 = scalar_lea.vmem [#allocation2], %s141
        %p143 = pneg %p53
        %p144 = pneg %p50
        %p145 = pneg %p81
        %p146 = pneg %p78
        %s147 = sand.u32 %s68, 1
        %s148 = scalar_lea.sflag [#allocation4], %s147
        %s149 = sand.u32 %s68, 1
        %s150 = smul.addr %s149, 8
        %s151 = scalar_lea.vmem [#allocation5], %s150
        %v152 = vld [vmem:[%s133] sm:$0x3]
        %v153 = vld [vmem:[%s133 + $0x2] sm:$0x3]
        %v154 = vld [vmem:[%s133 + $0x4] sm:$0x3]
        %v155 = vld [vmem:[%s133 + $0x6] sm:$0x3]
        %v156 = vmul.f32 %v152, %v152
        %v157 = vmul.f32 %v153, %v153
        %v158 = vmul.f32 %v154, %v154
        %v159 = vmul.f32 %v155, %v155
        %vm160 = vcmask 1041408
        %v161 = vsel %vm160, %v156, 0.0
        %v162 = vsel %vm160, %v157, 0.0
        %v163 = vadd.f32 %v161, %v162
        %v164 = vsel %vm160, %v158, 0.0
        %v165 = vadd.f32 %v163, %v164
        %v166 = vsel %vm160, %v159, 0.0
        %v167 = vadd.f32 %v165, %v166
        %v168 = vrsqrt.pop %v167
        %v169 = vmul.f32 %v152, %v168
        %v170 = vmul.f32 %v153, %v168
        %v171 = vmul.f32 %v154, %v168
        %v172 = vmul.f32 %v155, %v168
        %173 = vst [vmem:[%s151] sm:$0x3] %v169
        %174 = vst [vmem:[%s151 + $0x2] sm:$0x3] %v170
        %175 = vst [vmem:[%s151 + $0x4] sm:$0x3] %v171
        %176 = vst [vmem:[%s151 + $0x6] sm:$0x3] %v172
        %s177 = sand.u32 %s68, 1
        %s178 = scalar_lea.sflag [#allocation4], %s177
        %s179 = sand.u32 %s68, 1
        %s180 = smul.addr %s179, 8
        %s181 = scalar_lea.vmem [#allocation5], %s180
        // Predicated region
        $region29: #{tpu_custom_call.1} parent=23 // pred_check
          %p182 = pneg %p78
        $region30: #{tpu_custom_call.1} parent=23 // pred_check_branch
          %184 = sbr.rel (%p182) target = $region32
        $region31: #{tpu_custom_call.1} parent=23 // pred_region
          %s186 = ssub.s32 128, 128
          %187 = vsyncadd %s178, %s186
          %s188 = smul.addr %s22, 4
          %s189 = sadd.s32 %s23, %s188
          %s190 = smul.addr %s189, 32
          %s191 = scalar_lea.hbm %s1, %s190
          %s192 = sshll.u32 %s181, 4
          %s193 = int_to_ptr.vmem [resolvable:$true] %s192
          %198 = dma.vmem_to_hbm [thread:$0]  %s193, 128, %s191, %s178, 32, 32, 2
        $region32: #{tpu_custom_call.1} parent=23 // pred_fallthru
          _
      $region24: #{tpu_custom_call.1} parent=5 // pred_fallthru
        _
      %p199 = scmp.le.s32.totalorder 2, %s13
      // Predicated region
      $region33: #{tpu_custom_call.1} parent=5 // pred_check
        %p200 = pneg %p199
      $region34: #{tpu_custom_call.1} parent=5 // pred_check_branch
        %202 = sbr.rel (%p200) target = $region36
      $region35: #{tpu_custom_call.1} parent=5 // pred_region
        %s203 = ssub.s32 %s13, 2
        // Predicated region
        $region37: #{tpu_custom_call.1} parent=35 // pred_check
          %p204 = pneg %p84
        $region38: #{tpu_custom_call.1} parent=35 // pred_check_branch
          %206 = sbr.rel (%p204) target = $region40
        $region39: #{tpu_custom_call.1} parent=35 // pred_region
          %s207 = sand.u32 %s69, 1
          %s208 = scalar_lea.sflag [#allocation4], %s207
          %s209 = sand.u32 %s69, 1
          %s210 = smul.addr %s209, 8
          %s211 = scalar_lea.vmem [#allocation5], %s210
          %212 = dma.done %s208, 128
        $region40: #{tpu_custom_call.1} parent=35 // pred_fallthru
          _
      $region36: #{tpu_custom_call.1} parent=5 // pred_fallthru
        _
    $region6: #{tpu_custom_call.1} parent=1 // loop_footer
      %s17 = sadd.s32 1, %s13
    $region7: #{tpu_custom_call.1} parent=1 // loop_footer_branch
      %12 = sbr.rel target = $region3
    $region8: #{tpu_custom_call.1} parent=1 // loop_exit
      _
    %213 = vsyncpa [#allocation3], 1
    %s214 = scalar_lea.sflag [#allocation3], 1
    %215 = vsyncpa %s214, 1
    %216 = vsyncpa [#allocation4], 1
    %s217 = scalar_lea.sflag [#allocation4], 1
    %218 = vsyncpa %s217, 1

</llo_original>
